<compile_context>
chip_gen: v7x
topology: tpu7x:2x2x1
jax: 0.10.0
libtpu: 0.0.40
codegen_flags: <defaults>
</compile_context>

<pallas_src>
import functools

import jax
import jax.numpy as jnp
from jax.experimental import pallas as pl
from jax.experimental.pallas import tpu as pltpu

# ---- toy config (consistent with a small BERT hidden size) ----
BATCH = 2
SEQ = 8
HIDDEN = 32
LN_EPS = 1e-12


def _att_output_kernel(hs_ref, res_ref, w_ref, consts_ref, out_ref):
    """One row-slab of BertAttOutput.

    hs_ref           : (TILE_M, H)  bf16 activations (MXU operand)
    res_ref          : (TILE_M, H)  residual (any dtype, cast to f32 here)
    w_ref            : (H, H)       bf16 pre-transposed weight, layout [in, out]
    consts_ref       : (3, H)       f32 packed [bias; gamma; beta]
    out_ref          : (TILE_M, H)
    """
    x = hs_ref[...]                                      # (TILE_M, H)
    w = w_ref[...]                                       # (H, H)

    # Dense on the MXU: bf16 operands, f32 accumulation.
    y = jnp.dot(x, w, preferred_element_type=jnp.float32)

    c = consts_ref[...].astype(jnp.float32)              # (3, H)
    bias, gamma, beta = c[0:1, :], c[1:2, :], c[2:3, :]

    # bias + dropout(identity) + residual add, all in f32.
    y = y + bias + res_ref[...].astype(jnp.float32)

    # LayerNorm over the hidden (lane) axis.
    # Two INDEPENDENT reductions (sum, sum-of-squares) -> overlap in the XLU.
    mean = jnp.mean(y, axis=-1, keepdims=True)
    mean_sq = jnp.mean(y * y, axis=-1, keepdims=True)
    var = mean_sq - mean * mean
    normed = (y - mean) * jax.lax.rsqrt(var + LN_EPS)

    # Single fused wide store of the whole tile.
    out_ref[...] = (normed * gamma + beta).astype(out_ref.dtype)


def prepare_params(params, matmul_dtype=jnp.bfloat16):
    """One-time parameter prep (NOT in the per-call jit path).

    weight [out,in] -> [in,out], cast to the MXU dtype; bias/gamma/beta packed as (3, H) f32.
    """
    w_t = jnp.asarray(params["weight"]).T.astype(matmul_dtype)
    consts = jnp.stack(
        [jnp.asarray(params["bias"]),
         jnp.asarray(params["gamma"]),
         jnp.asarray(params["beta"])],
        axis=0,
    ).astype(jnp.float32)
    return w_t, consts


def _pick_block_rows(n_rows):
    """Largest divisor of n_rows that is a multiple of 8 and <= min(1024, n_rows // 2).

    Guarantees >= 2 grid steps (so the 'parallel' axis shards across v7x's two TensorCores)
    while keeping tiles large enough to amortize per-grid-step overhead.
    """
    if n_rows < 16:
        return n_rows
    target = min(1024, n_rows // 2)
    best = None
    d = 8
    while d <= target:
        if n_rows % d == 0:
            best = d
        d += 8
    return best if best is not None else n_rows


@functools.partial(jax.jit, static_argnames=("block_rows", "out_dtype"))
def bert_att_output(hidden_states, input_tensor, w_t, consts, *,
                    block_rows=None, out_dtype=None):
    """hidden_states, input_tensor: (B, S, H). w_t: (H, H) [in,out]. consts: (3, H).

    Returns LayerNorm(dense(hidden_states) + input_tensor), shape (B, S, H).
    """
    B, S, H = hidden_states.shape
    N = B * S
    if out_dtype is None:
        out_dtype = hidden_states.dtype
    if block_rows is None:
        block_rows = _pick_block_rows(N)
    # TODO(synk): handle ragged row counts (N % block_rows != 0) with pl.cdiv grid + masking.
    assert N % block_rows == 0, "row count must tile evenly"
    grid = (N // block_rows,)

    # Collapse batch & sequence onto the sublane axis; cast activations to the MXU dtype.
    hs2 = hidden_states.reshape(N, H).astype(w_t.dtype)
    res2 = input_tensor.reshape(N, H)

    row_spec = pl.BlockSpec((block_rows, H), lambda i: (i, 0))
    out_spec = pl.BlockSpec((block_rows, H), lambda i: (i, 0))
    # Constant-index (resident) inputs: single-buffered to halve their VMEM footprint.
    w_spec = pl.BlockSpec((H, H), lambda i: (0, 0), pipeline_mode=pl.Buffered(1))
    c_spec = pl.BlockSpec((3, H), lambda i: (0, 0), pipeline_mode=pl.Buffered(1))

    # VMEM budget estimate: double-buffered row tiles + single-buffered weight/consts.
    bpe = lambda dt: jnp.dtype(dt).itemsize
    tile_bytes = block_rows * H * (bpe(hs2.dtype) + bpe(res2.dtype) + bpe(out_dtype))
    est_bytes = 2 * tile_bytes + H * H * bpe(w_t.dtype) + 3 * H * 4
    compiler_kwargs = dict(dimension_semantics=("parallel",))
    if est_bytes > 12 * 1024 * 1024:
        compiler_kwargs["vmem_limit_bytes"] = min(2 * est_bytes, 100 * 1024 * 1024)

    out2 = pl.pallas_call(
        _att_output_kernel,
        out_shape=jax.ShapeDtypeStruct((N, H), out_dtype),
        grid_spec=pltpu.PrefetchScalarGridSpec(
            num_scalar_prefetch=0,
            grid=grid,
            in_specs=[
                row_spec,   # hidden_states slab (bf16)
                row_spec,   # residual slab
                w_spec,     # W^T resident, single-buffered
                c_spec,     # packed [bias; gamma; beta], single-buffered
            ],
            out_specs=out_spec,
        ),
        compiler_params=pltpu.CompilerParams(**compiler_kwargs),
    )(hs2, res2, w_t, consts)

    return out2.reshape(B, S, H)


def _reference(hidden_states, input_tensor, p):
    """Pure-JAX f32 reference mirroring the PyTorch forward (dropout = identity)."""
    y = jnp.einsum("bsh,oh->bso", hidden_states, p["weight"]) + p["bias"]
    y = y + input_tensor
    mean = jnp.mean(y, axis=-1, keepdims=True)
    var = jnp.mean((y - mean) ** 2, axis=-1, keepdims=True)
    return (y - mean) * jax.lax.rsqrt(var + LN_EPS) * p["gamma"] + p["beta"]


if __name__ == "__main__":
    key = jax.random.PRNGKey(0)
    k_w, k_b, k_g, k_be, k_hs, k_in = jax.random.split(key, 6)

    # PyTorch-style parameters: weight is [out_features, in_features].
    params = {
        "weight": (0.05 * jax.random.normal(k_w, (HIDDEN, HIDDEN))).astype(jnp.float32),
        "bias": (0.01 * jax.random.normal(k_b, (HIDDEN,))).astype(jnp.float32),
        "gamma": (1.0 + 0.1 * jax.random.normal(k_g, (HIDDEN,))).astype(jnp.float32),
        "beta": (0.1 * jax.random.normal(k_be, (HIDDEN,))).astype(jnp.float32),
    }

    hidden_states = jax.random.normal(k_hs, (BATCH, SEQ, HIDDEN)).astype(jnp.float32)
    input_tensor = jax.random.normal(k_in, (BATCH, SEQ, HIDDEN)).astype(jnp.float32)

    # One-time weight prep outside the jitted per-call path (transpose + bf16 cast + packing).
    w_t, consts = prepare_params(params, matmul_dtype=jnp.bfloat16)

    out = bert_att_output(hidden_states, input_tensor, w_t, consts)
    out = jax.block_until_ready(out)

    ref = _reference(hidden_states, input_tensor, params)
    assert out.shape == (BATCH, SEQ, HIDDEN)
    # bf16 MXU operands (f32 accumulation) -> tolerance loosened vs the pure-f32 version.
    assert jnp.allclose(out, ref, atol=2e-2, rtol=2e-2), "mismatch vs reference"

    print("KERNEL_OK")
</pallas_src>

<mosaic_0001>
module attributes {stable_mosaic.version = 11 : i64} {
  func.func @_att_output_kernel(%arg0: i32, %arg1: memref<8x32xbf16, #tpu.memory_space<vmem>>, %arg2: memref<8x32xf32, #tpu.memory_space<vmem>>, %arg3: memref<32x32xbf16, #tpu.memory_space<vmem>>, %arg4: memref<3x32xf32, #tpu.memory_space<vmem>>, %arg5: memref<8x32xf32, #tpu.memory_space<vmem>>) attributes {dimension_semantics = [#tpu.dimension_semantics<parallel>], iteration_bounds = array<i64: 2>, scalar_prefetch = 0 : i64, scratch_operands = 0 : i64, tpu.core_type = #tpu.core_type<tc>, window_params = [{transform_indices = @transform_0, window_bounds = array<i64: 8, 32>}, {transform_indices = @transform_1, window_bounds = array<i64: 8, 32>}, {pipeline_mode = #tpu.pipeline_mode<synchronous>, transform_indices = @transform_2, window_bounds = array<i64: 32, 32>}, {pipeline_mode = #tpu.pipeline_mode<synchronous>, transform_indices = @transform_3, window_bounds = array<i64: 3, 32>}, {transform_indices = @transform_4, window_bounds = array<i64: 8, 32>}]} {
    %c0 = arith.constant 0 : index
    %c0_0 = arith.constant 0 : index
    %0 = vector.load %arg1[%c0, %c0_0] : memref<8x32xbf16, #tpu.memory_space<vmem>>, vector<8x32xbf16>
    %c0_1 = arith.constant 0 : index
    %c0_2 = arith.constant 0 : index
    %1 = vector.load %arg3[%c0_1, %c0_2] : memref<32x32xbf16, #tpu.memory_space<vmem>>, vector<32x32xbf16>
    %cst = arith.constant dense<0.000000e+00> : vector<8x32xf32>
    %2 = tpu.matmul %0, %1, %cst {dimension_numbers = #tpu.dot_dimension_numbers<[1], [0], [0], [1], [0, 0, 1, 1], [], []>} : vector<8x32xbf16>, vector<32x32xbf16>, vector<8x32xf32> -> vector<8x32xf32>
    %c0_3 = arith.constant 0 : index
    %c0_4 = arith.constant 0 : index
    %3 = vector.load %arg4[%c0_3, %c0_4] : memref<3x32xf32, #tpu.memory_space<vmem>>, vector<3x32xf32>
    %4 = vector.extract_strided_slice %3 {offsets = [0, 0], sizes = [1, 32], strides = [1, 1]} : vector<3x32xf32> to vector<1x32xf32>
    %5 = vector.extract_strided_slice %3 {offsets = [1, 0], sizes = [1, 32], strides = [1, 1]} : vector<3x32xf32> to vector<1x32xf32>
    %6 = vector.extract_strided_slice %3 {offsets = [2, 0], sizes = [1, 32], strides = [1, 1]} : vector<3x32xf32> to vector<1x32xf32>
    %7 = vector.broadcast %4 : vector<1x32xf32> to vector<8x32xf32>
    %8 = arith.addf %2, %7 : vector<8x32xf32>
    %c0_5 = arith.constant 0 : index
    %c0_6 = arith.constant 0 : index
    %9 = vector.load %arg2[%c0_5, %c0_6] : memref<8x32xf32, #tpu.memory_space<vmem>>, vector<8x32xf32>
    %10 = arith.addf %8, %9 : vector<8x32xf32>
    %cst_7 = arith.constant dense<0.000000e+00> : vector<8xf32>
    %11 = vector.multi_reduction <add>, %10, %cst_7 [1] : vector<8x32xf32> to vector<8xf32>
    %12 = vector.shape_cast %11 : vector<8xf32> to vector<8x1xf32>
    %cst_8 = arith.constant 3.200000e+01 : f32
    %13 = vector.broadcast %cst_8 : f32 to vector<8x1xf32>
    %14 = arith.divf %12, %13 : vector<8x1xf32>
    %15 = arith.mulf %10, %10 : vector<8x32xf32>
    %cst_9 = arith.constant dense<0.000000e+00> : vector<8xf32>
    %16 = vector.multi_reduction <add>, %15, %cst_9 [1] : vector<8x32xf32> to vector<8xf32>
    %17 = vector.shape_cast %16 : vector<8xf32> to vector<8x1xf32>
    %cst_10 = arith.constant 3.200000e+01 : f32
    %18 = vector.broadcast %cst_10 : f32 to vector<8x1xf32>
    %19 = arith.divf %17, %18 : vector<8x1xf32>
    %20 = arith.mulf %14, %14 : vector<8x1xf32>
    %21 = arith.subf %19, %20 : vector<8x1xf32>
    %22 = vector.broadcast %14 : vector<8x1xf32> to vector<8x32xf32>
    %23 = arith.subf %10, %22 : vector<8x32xf32>
    %cst_11 = arith.constant 9.99999996E-13 : f32
    %24 = vector.broadcast %cst_11 : f32 to vector<8x1xf32>
    %25 = arith.addf %21, %24 : vector<8x1xf32>
    %26 = math.rsqrt %25 : vector<8x1xf32>
    %27 = vector.broadcast %26 : vector<8x1xf32> to vector<8x32xf32>
    %28 = arith.mulf %23, %27 : vector<8x32xf32>
    %29 = vector.broadcast %5 : vector<1x32xf32> to vector<8x32xf32>
    %30 = arith.mulf %28, %29 : vector<8x32xf32>
    %31 = vector.broadcast %6 : vector<1x32xf32> to vector<8x32xf32>
    %32 = arith.addf %30, %31 : vector<8x32xf32>
    %c0_12 = arith.constant 0 : index
    %c0_13 = arith.constant 0 : index
    %33 = vector.load %arg5[%c0_12, %c0_13] : memref<8x32xf32, #tpu.memory_space<vmem>>, vector<8x32xf32>
    tpu.vector_store %arg5[%c0_12, %c0_13], %32 {strides = array<i32>} : memref<8x32xf32, #tpu.memory_space<vmem>>, vector<8x32xf32>,
    return
  }
  func.func @transform_0(%arg0: i32) -> (i32, i32) {
    %c0_i32 = arith.constant 0 : i32
    %c0_i32_0 = arith.constant 0 : i32
    return %arg0, %c0_i32 : i32, i32
  }
  func.func @transform_1(%arg0: i32) -> (i32, i32) {
    %c0_i32 = arith.constant 0 : i32
    %c0_i32_0 = arith.constant 0 : i32
    return %arg0, %c0_i32 : i32, i32
  }
  func.func @transform_2(%arg0: i32) -> (i32, i32) {
    %c0_i32 = arith.constant 0 : i32
    %c0_i32_0 = arith.constant 0 : i32
    %c0_i32_1 = arith.constant 0 : i32
    return %c0_i32, %c0_i32_0 : i32, i32
  }
  func.func @transform_3(%arg0: i32) -> (i32, i32) {
    %c0_i32 = arith.constant 0 : i32
    %c0_i32_0 = arith.constant 0 : i32
    %c0_i32_1 = arith.constant 0 : i32
    return %c0_i32, %c0_i32_0 : i32, i32
  }
  func.func @transform_4(%arg0: i32) -> (i32, i32) {
    %c0_i32 = arith.constant 0 : i32
    %c0_i32_0 = arith.constant 0 : i32
    return %arg0, %c0_i32 : i32, i32
  }
}

</mosaic_0001>

<llo_original>
// kernel: bert_att_output.1
$region0: #{bert_att_output.1}
  #allocation0 [shape = 'u32[]', space=smem, size = 0x4, offset = 0x4, fixed_abs, tag = 'smem constant byte address 0x4 - core index']
  #allocation1 [shape = 'u32[144,128]{1,0:T(1,128)}', space=vmem, size = 0x12000, scoped, tag = 'internal scratch']
  %s0 = inlined_call_operand.vmem [shape: bf16[16,32], index: 0, kind: input, shape index: {}]
  %s1 = inlined_call_operand.vmem [shape: f32[16,32], index: 1, kind: input, shape index: {}]
  %s2 = inlined_call_operand.vmem [shape: bf16[32,32], index: 2, kind: input, shape index: {}]
  %s3 = inlined_call_operand.vmem [shape: f32[3,32], index: 3, kind: input, shape index: {}]
  %s4 = inlined_call_operand.hbm [shape: f32[16,32], index: 4, kind: output, shape index: {}]
  %s5 = sld [smem:[#allocation0]]
  $region49: #{bert_att_output.1} parent=0
    _
  %s7 = ssub.s32 1, %s5
  %s8 = scalar_select 0, %s7, %s5
  $region1: #{bert_att_output.1} parent=0
    #allocation2 [shape = 'u8[8192]{0}', space=vmem, size = 0x2000, scoped, tag = 'output window, operand 0']
    #allocation3 [shape = 's32[2]{0}', space=sflag, size = 0x8, scoped, tag = 'scoped memory for bert_att_output.1']
    %9 = vsyncpa [#allocation3], 0
    %s10 = scalar_lea.sflag [#allocation3], 1
    %11 = vsyncpa %s10, 0
    loop: start=0, step=1, limit=4
    $region2: #{bert_att_output.1} parent=1 // loop_pre_header
      _
    $region3: #{bert_att_output.1} parent=1 // loop_header
      %s13 = sphi 0, %s17
      %p14 = scmp.ge.s32.totalorder %s13, 4
      %s23 = sphi 0, %s25
      %s26 = sphi 0, %s23
      %s27 = sphi 0, %s26
      %s43 = sphi 0, %s27
      %s49 = sphi 0, %s51
      %s52 = sphi 0, %s49
      %s53 = sphi 0, %s52
      %s69 = sphi 0, %s53
      %s73 = sphi 0, %s73
      %s75 = sphi 0, %s73
      %s76 = sphi 0, %s75
      %s90 = sphi 0, %s76
      %s94 = sphi 0, %s94
      %s96 = sphi 0, %s94
      %s97 = sphi 0, %s96
      %s111 = sphi 0, %s97
      %s117 = sphi 0, %s119
      %s120 = sphi 0, %s117
      %s121 = sphi 0, %s120
      %s137 = sphi 0, %s121
    $region4: #{bert_att_output.1} parent=1 // loop_header_branch
      %16 = sbr.rel (%p14) target = $region8
    $region5: #{bert_att_output.1} parent=1 // loop_body
      %s18 = ssub.s32 %s13, 1
      %s19 = ssub.s32 %s13, 2
      %s20 = sadd.s32 %s13, 1
      %s21 = ssub.s32 %s13, %s20
      %p22 = scmp.eq.s32.totalorder %s21, 0
      %s24 = sadd.s32 %s23, 1
      %s25 = scalar_select %p22, %s23, %s24
      %p28 = pneg %p22
      %p29 = scmp.eq.s32.totalorder %s13, 1
      %p30 = por %p28, %p29
      %p31 = scmp.ne.s32.totalorder %s23, %s26
      %p32 = scmp.eq.s32.totalorder %s13, 0
      %p33 = por %p31, %p32
      %p34 = scmp.ne.s32.totalorder %s23, %s26
      %p35 = scmp.eq.s32.totalorder %s18, 1
      %p36 = por %p34, %p35
      %p37 = scmp.ne.s32.totalorder %s26, %s27
      %p38 = scmp.eq.s32.totalorder %s18, 0
      %p39 = por %p37, %p38
      %p40 = scmp.ne.s32.totalorder %s26, %s27
      %p41 = scmp.eq.s32.totalorder %s19, 1
      %p42 = por %p40, %p41
      %p44 = scmp.ne.s32.totalorder %s27, %s43
      %p45 = scmp.eq.s32.totalorder %s19, 0
      %p46 = por %p44, %p45
      %s47 = ssub.s32 %s13, %s20
      %p48 = scmp.eq.s32.totalorder %s47, 0
      %s50 = sadd.s32 %s49, 1
      %s51 = scalar_select %p48, %s49, %s50
      %p54 = pneg %p48
      %p55 = scmp.eq.s32.totalorder %s13, 1
      %p56 = por %p54, %p55
      %p57 = scmp.ne.s32.totalorder %s49, %s52
      %p58 = scmp.eq.s32.totalorder %s13, 0
      %p59 = por %p57, %p58
      %p60 = scmp.ne.s32.totalorder %s49, %s52
      %p61 = scmp.eq.s32.totalorder %s18, 1
      %p62 = por %p60, %p61
      %p63 = scmp.ne.s32.totalorder %s52, %s53
      %p64 = scmp.eq.s32.totalorder %s18, 0
      %p65 = por %p63, %p64
      %p66 = scmp.ne.s32.totalorder %s52, %s53
      %p67 = scmp.eq.s32.totalorder %s19, 1
      %p68 = por %p66, %p67
      %p70 = scmp.ne.s32.totalorder %s53, %s69
      %p71 = scmp.eq.s32.totalorder %s19, 0
      %p72 = por %p70, %p71
      %s74 = sadd.s32 %s73, 1
      %p77 = scmp.eq.s32.totalorder %s13, 1
      %p78 = scmp.ne.s32.totalorder %s73, %s75
      %p79 = scmp.eq.s32.totalorder %s13, 0
      %p80 = por %p78, %p79
      %p81 = scmp.ne.s32.totalorder %s73, %s75
      %p82 = scmp.eq.s32.totalorder %s18, 1
      %p83 = por %p81, %p82
      %p84 = scmp.ne.s32.totalorder %s75, %s76
      %p85 = scmp.eq.s32.totalorder %s18, 0
      %p86 = por %p84, %p85
      %p87 = scmp.ne.s32.totalorder %s75, %s76
      %p88 = scmp.eq.s32.totalorder %s19, 1
      %p89 = por %p87, %p88
      %p91 = scmp.ne.s32.totalorder %s76, %s90
      %p92 = scmp.eq.s32.totalorder %s19, 0
      %p93 = por %p91, %p92
      %s95 = sadd.s32 %s94, 1
      %p98 = scmp.eq.s32.totalorder %s13, 1
      %p99 = scmp.ne.s32.totalorder %s94, %s96
      %p100 = scmp.eq.s32.totalorder %s13, 0
      %p101 = por %p99, %p100
      %p102 = scmp.ne.s32.totalorder %s94, %s96
      %p103 = scmp.eq.s32.totalorder %s18, 1
      %p104 = por %p102, %p103
      %p105 = scmp.ne.s32.totalorder %s96, %s97
      %p106 = scmp.eq.s32.totalorder %s18, 0
      %p107 = por %p105, %p106
      %p108 = scmp.ne.s32.totalorder %s96, %s97
      %p109 = scmp.eq.s32.totalorder %s19, 1
      %p110 = por %p108, %p109
      %p112 = scmp.ne.s32.totalorder %s97, %s111
      %p113 = scmp.eq.s32.totalorder %s19, 0
      %p114 = por %p112, %p113
      %s115 = ssub.s32 %s13, %s20
      %p116 = scmp.eq.s32.totalorder %s115, 0
      %s118 = sadd.s32 %s117, 1
      %s119 = scalar_select %p116, %s117, %s118
      %p122 = pneg %p116
      %p123 = scmp.eq.s32.totalorder %s13, 1
      %p124 = por %p122, %p123
      %p125 = scmp.ne.s32.totalorder %s117, %s120
      %p126 = scmp.eq.s32.totalorder %s13, 0
      %p127 = por %p125, %p126
      %p128 = scmp.ne.s32.totalorder %s117, %s120
      %p129 = scmp.eq.s32.totalorder %s18, 1
      %p130 = por %p128, %p129
      %p131 = scmp.ne.s32.totalorder %s120, %s121
      %p132 = scmp.eq.s32.totalorder %s18, 0
      %p133 = por %p131, %p132
      %p134 = scmp.ne.s32.totalorder %s120, %s121
      %p135 = scmp.eq.s32.totalorder %s19, 1
      %p136 = por %p134, %p135
      %p138 = scmp.ne.s32.totalorder %s121, %s137
      %p139 = scmp.eq.s32.totalorder %s19, 0
      %p140 = por %p138, %p139
      %p141 = scmp.le.s32.totalorder 1, %s13
      %p142 = scmp.lt.s32.totalorder %s13, 3
      %p143 = pnand %p141, %p142
      %p144 = pneg %p143
      // Predicated region
      $region9: #{bert_att_output.1} parent=5 // pred_check
        _
      $region10: #{bert_att_output.1} parent=5 // pred_check_branch
        %146 = sbr.rel (%p143) target = $region12
      $region11: #{bert_att_output.1} parent=5 // pred_region
        %s147 = ssub.s32 %s13, 1
        // Predicated region
        $region13: #{bert_att_output.1} parent=11 // pred_check
          %p148 = pneg %p86
        $region14: #{bert_att_output.1} parent=11 // pred_check_branch
          %150 = sbr.rel (%p148) target = $region16
        $region15: #{bert_att_output.1} parent=11 // pred_region
          _
        $region16: #{bert_att_output.1} parent=11 // pred_fallthru
          _
        // Predicated region
        $region17: #{bert_att_output.1} parent=11 // pred_check
          %p151 = pneg %p107
        $region18: #{bert_att_output.1} parent=11 // pred_check_branch
          %153 = sbr.rel (%p151) target = $region20
        $region19: #{bert_att_output.1} parent=11 // pred_region
          _
        $region20: #{bert_att_output.1} parent=11 // pred_fallthru
          _
      $region12: #{bert_att_output.1} parent=5 // pred_fallthru
        _
      %p154 = scmp.lt.s32.totalorder %s13, 2
      // Predicated region
      $region21: #{bert_att_output.1} parent=5 // pred_check
        %p155 = pneg %p154
      $region22: #{bert_att_output.1} parent=5 // pred_check_branch
        %157 = sbr.rel (%p155) target = $region24
      $region23: #{bert_att_output.1} parent=5 // pred_region
        // Predicated region
        $region25: #{bert_att_output.1} parent=23 // pred_check
          %p158 = pneg %p33
        $region26: #{bert_att_output.1} parent=23 // pred_check_branch
          %160 = sbr.rel (%p158) target = $region28
        $region27: #{bert_att_output.1} parent=23 // pred_region
          %p161 = scmp.lt.s32.totalorder %s13, 1
          %s162 = scalar_select %p161, %s13, 1
          %s163 = smul.addr %s162, 4
          %s164 = scalar_lea.vmem %s0, %s163
        $region28: #{bert_att_output.1} parent=23 // pred_fallthru
          _
        // Predicated region
        $region29: #{bert_att_output.1} parent=23 // pred_check
          %p165 = pneg %p59
        $region30: #{bert_att_output.1} parent=23 // pred_check_branch
          %167 = sbr.rel (%p165) target = $region32
        $region31: #{bert_att_output.1} parent=23 // pred_region
          %p168 = scmp.lt.s32.totalorder %s13, 1
          %s169 = scalar_select %p168, %s13, 1
          %s170 = smul.addr %s169, 8
          %s171 = scalar_lea.vmem %s1, %s170
        $region32: #{bert_att_output.1} parent=23 // pred_fallthru
          _
      $region24: #{bert_att_output.1} parent=5 // pred_fallthru
        _
      %p172 = scmp.le.s32.totalorder 1, %s13
      %p173 = scmp.lt.s32.totalorder %s13, 3
      %p174 = pnand %p172, %p173
      %p175 = pneg %p174
      // Predicated region
      $region33: #{bert_att_output.1} parent=5 // pred_check
        _
      $region34: #{bert_att_output.1} parent=5 // pred_check_branch
        %177 = sbr.rel (%p174) target = $region36
      $region35: #{bert_att_output.1} parent=5 // pred_region
        %s178 = ssub.s32 %s13, 1
        %p179 = scmp.lt.s32.totalorder %s18, 1
        %s180 = scalar_select %p179, %s18, 1
        %s181 = smul.addr %s180, 4
        %s182 = scalar_lea.vmem %s0, %s181
        %p183 = pneg %p39
        %p184 = pneg %p36
        %p185 = scmp.lt.s32.totalorder %s18, 1
        %s186 = scalar_select %p185, %s18, 1
        %s187 = smul.addr %s186, 8
        %s188 = scalar_lea.vmem %s1, %s187
        %p189 = pneg %p65
        %p190 = pneg %p62
        %p191 = pneg %p86
        %p192 = pneg %p83
        %p193 = pneg %p107
        %p194 = pneg %p104
        %p195 = pneg %p133
        %p196 = pneg %p130
        %s197 = sand.u32 %s120, 1
        %s198 = scalar_lea.sflag [#allocation3], %s197
        %s199 = sand.u32 %s120, 1
        %s200 = smul.addr %s199, 8
        %s201 = scalar_lea.vmem [#allocation2], %s200
        %p202 = scmp.lt.s32.totalorder %s18, 1
        %s203 = scalar_select %p202, %s18, 1
        %s204 = smul.addr %s203, 4
        %s205 = scalar_lea.vmem %s0, %s204
        %p206 = scmp.lt.s32.totalorder %s18, 1
        %s207 = scalar_select %p206, %s18, 1
        %s208 = smul.addr %s207, 8
        %s209 = scalar_lea.vmem %s1, %s208
        %v211 = vld [vmem:[%s205] sm:$0xf]
        %v212 = vld [vmem:[%s2] sm:$0xf]
        %v213 = vld [vmem:[%s2 + $0x4] sm:$0xf]
        %v214 = vld [vmem:[%s2 + $0x8] sm:$0xf]
        %v215 = vld [vmem:[%s2 + $0xc] sm:$0xf]
        %v216 = vld [vmem:[%s3] sm:$0x7]
        %v217 = vlaneseq
        %v218 = vshrl.u32 %v217, 7
        %v219 = vsub.s32 0, %v218
        %v220 = vrot.slane %v216, %v219
        %v225 = vunpack.c.l.b16 %v212
        %v226 = vunpack.c.l.b16 %v213
        %v227 = vunpack.c.l.b16 %v214
        %v228 = vunpack.c.l.b16 %v215
        %v229 = vpack.c.b16 %v226, %v225
        %v230 = vpack.c.b16 %v228, %v227
        %vm233 = vcmask 261120
        %v235 = vsel %vm233, %v211, 0
        %237 = vmatprep.subr.bf16.mxu0 0
        %238 = vmatpush1.bf16.msra.mxu0 %v229
        %239 = vmatprep.subr.bf16.mxu0 0
        %240 = vmatpush1.bf16.msra.mxu0 %v230
        %241 = vmatprep.subr.bf16.mxu0 0
        %242 = vmatpush1.bf16.msra.mxu0 0
        %243 = vmatprep.subr.bf16.mxu0 0
        %244 = vmatpush1.bf16.msra.mxu0 0
        %245 = vmatprep.subr.bf16.mxu0 0
        %246 = vmatpush1.bf16.msra.mxu0 0
        %247 = vmatprep.subr.bf16.mxu0 0
        %248 = vmatpush1.bf16.msra.mxu0 0
        %249 = vmatprep.subr.bf16.mxu0 0
        %250 = vmatpush1.bf16.msra.mxu0 0
        %251 = vmatprep.subr.bf16.mxu0 0
        %252 = vmatpush1.bf16.msra.mxu0 0
        %253 = vmatprep.subr.bf16.mxu0 0
        %254 = vmatpush1.bf16.msra.mxu0 0
        %255 = vmatprep.subr.bf16.mxu0 0
        %256 = vmatpush1.bf16.msra.mxu0 0
        %257 = vmatprep.subr.bf16.mxu0 0
        %258 = vmatpush1.bf16.msra.mxu0 0
        %259 = vmatprep.subr.bf16.mxu0 0
        %260 = vmatpush1.bf16.msra.mxu0 0
        %261 = vmatprep.subr.bf16.mxu0 0
        %262 = vmatpush1.bf16.msra.mxu0 0
        %263 = vmatprep.subr.bf16.mxu0 0
        %264 = vmatpush1.bf16.msra.mxu0 0
        %265 = vmatprep.subr.bf16.mxu0 0
        %266 = vmatpush1.bf16.msra.mxu0 0
        %267 = vmatprep.subr.bf16.mxu0 0
        %268 = vmatpush1.bf16.msra.mxu0 0
        %269 = vmatprep.mubr.bf16.mxu0 0
        %270 = vmatmul.mubr.bf16.gmra.mrb[0].mxu0 %v235
        %v271 = vpop.f32.mrb[0].mxu0
        %v272 = vadd.f32 %v220, %v271
        %v273 = vpop.f32.mrb[0].mxu0
        %v274 = vpop.f32.mrb[0].mxu0
        %v275 = vpop.f32.mrb[0].mxu0
        %276 = vdwg.mxu0
        %v277 = vld [vmem:[%s209] sm:$0xff]
        %v278 = vadd.f32 %v272, %v277
        %v279 = vsel %vm233, %v278, 0.0
        %280 = vadd.xlane.f32.xlu0 %v279
        %v281 = vpop.xlane.xlu0 %280
        %v282 = vrcp.pop 32.0
        %v283 = vmul.f32 %v281, %v282
        %v284 = vmul.f32 %v278, %v278
        %v285 = vsel %vm233, %v284, 0.0
        %286 = vadd.xlane.f32.xlu0 %v285
        %v287 = vpop.xlane.xlu0 %286
        %v288 = vmul.f32 %v287, %v282
        %v289 = vmul.f32 %v283, %v283
        %v290 = vsub.f32 %v288, %v289
        %v291 = vsub.f32 %v278, %v283
        %v292 = vadd.f32 %v290, 1e-12
        %v293 = vrsqrt.pop %v292
        %v294 = vmul.f32 %v291, %v293
        %v295 = vlaneseq
        %v296 = vshrl.u32 %v295, 7
        %v297 = vsub.s32 1, %v296
        %v298 = vrot.slane %v216, %v297
        %v299 = vmul.f32 %v294, %v298
        %v300 = vlaneseq
        %v301 = vshrl.u32 %v300, 7
        %v302 = vsub.s32 2, %v301
        %v303 = vrot.slane %v216, %v302
        %v304 = vadd.f32 %v299, %v303
        %305 = vst.msk [vmem:[%s201] sm:$0xff] %vm233, %v304
        %s306 = sand.u32 %s120, 1
        %s307 = scalar_lea.sflag [#allocation3], %s306
        %s308 = sand.u32 %s120, 1
        %s309 = smul.addr %s308, 8
        %s310 = scalar_lea.vmem [#allocation2], %s309
        // Predicated region
        $region37: #{bert_att_output.1} parent=35 // pred_check
          %p311 = pneg %p130
        $region38: #{bert_att_output.1} parent=35 // pred_check_branch
          %313 = sbr.rel (%p311) target = $region40
        $region39: #{bert_att_output.1} parent=35 // pred_region
          %s315 = ssub.s32 128, 128
          %316 = vsyncadd %s307, %s315
          %s317 = smul.addr %s18, 128
          %s318 = scalar_lea.hbm %s4, %s317
          %s320 = sshll.u32 %s310, 4
          %s321 = int_to_ptr.vmem [resolvable:$true] %s320
          %323 = dma.vmem_to_hbm [thread:$0]  %s321, 128, %s318, %s307
        $region40: #{bert_att_output.1} parent=35 // pred_fallthru
          _
      $region36: #{bert_att_output.1} parent=5 // pred_fallthru
        _
      %p324 = scmp.le.s32.totalorder 2, %s13
      // Predicated region
      $region41: #{bert_att_output.1} parent=5 // pred_check
        %p325 = pneg %p324
      $region42: #{bert_att_output.1} parent=5 // pred_check_branch
        %327 = sbr.rel (%p325) target = $region44
      $region43: #{bert_att_output.1} parent=5 // pred_region
        %s328 = ssub.s32 %s13, 2
        // Predicated region
        $region45: #{bert_att_output.1} parent=43 // pred_check
          %p329 = pneg %p136
        $region46: #{bert_att_output.1} parent=43 // pred_check_branch
          %331 = sbr.rel (%p329) target = $region48
        $region47: #{bert_att_output.1} parent=43 // pred_region
          %s332 = sand.u32 %s121, 1
          %s333 = scalar_lea.sflag [#allocation3], %s332
          %s334 = sand.u32 %s121, 1
          %s335 = smul.addr %s334, 8
          %s336 = scalar_lea.vmem [#allocation2], %s335
          %337 = dma.done %s333, 128
        $region48: #{bert_att_output.1} parent=43 // pred_fallthru
          _
      $region44: #{bert_att_output.1} parent=5 // pred_fallthru
        _
    $region6: #{bert_att_output.1} parent=1 // loop_footer
      %s17 = sadd.s32 1, %s13
    $region7: #{bert_att_output.1} parent=1 // loop_footer_branch
      %12 = sbr.rel target = $region3
    $region8: #{bert_att_output.1} parent=1 // loop_exit
      _
    %338 = vsyncpa [#allocation3], 1
    %s339 = scalar_lea.sflag [#allocation3], 1
    %340 = vsyncpa %s339, 1

</llo_original>
